<compile_context>
chip_gen: v5e
topology: v5e:2x2
jax: 0.10.0
libtpu: 0.0.40
codegen_flags: <defaults>
</compile_context>

<pallas_src>
import math

import jax
import jax.numpy as jnp
import numpy as np
from jax.experimental import pallas as pl
from jax.experimental.pallas import tpu as pltpu

# --- module hyper-parameters (label_rate = (2, 1), k = 3, channels = 128) ---
K = 3                       # conv-transpose kernel size
STRIDE = 2                  # upsample rate = label_rate[0]; label_rate[1] must be 1
RES_SCALE = math.sqrt(0.4)  # residual_scale = 0.4 -> sqrt in __init__
GN_EPS = 1e-5               # nn.GroupNorm default eps


def conv_upsampler_kernel(x_ref, w_ref, gamma_ref, beta_ref, out_ref):
    """One batch-block per grid step.

    x_ref:     (Bb, T, C)     bf16 input block (channels-last)
    w_ref:     (C, K*C)       bf16 conv-transpose weight, w_flat[ci, kk*C+co]
    gamma_ref: (1, C)         f32 GroupNorm scale, pre-multiplied by RES_SCALE
    beta_ref:  (1, C)         f32 GroupNorm shift, pre-multiplied by RES_SCALE
    out_ref:   (Bb, T, S*C)   bf16 output block; lane index = phase*C + channel
                              (wrapper reshape to (B, T*S, C) is contiguous)
    """
    Bb, T, C = x_ref.shape
    s, k = STRIDE, K
    # phase decomposition below is specific to k=3, s=2
    assert s == 2 and k == 3

    x = x_ref[...]                                            # (Bb, T, C) bf16
    x2d = x.reshape(Bb * T, C)                                # M = Bb*T

    # ---- ConvTranspose1d: one fused MXU matmul for all taps & batch rows ----
    p_all = jnp.dot(x2d, w_ref[...],
                    preferred_element_type=jnp.float32)       # (M, K*C) f32
    p0 = p_all[:, 0 * C:1 * C]                                # tap 0 -> rows 2t
    p1 = p_all[:, 1 * C:2 * C]                                # tap 1 -> rows 2t+1
    p2 = p_all[:, 2 * C:3 * C]                                # tap 2 -> rows 2t+2
    # p_all's live range ends here (stats are rebuilt from even/odd/tail below).

    # shift tap-2 down one time step: XLU sublane rotate, then zero row 0 of
    # each batch element (also removes the cross-batch wrap rows).
    p2s = pltpu.roll(p2, shift=1, axis=0)                     # (M, C)

    p0 = p0.reshape(Bb, T, C)
    p1 = p1.reshape(Bb, T, C)
    p2 = p2.reshape(Bb, T, C)
    p2s = p2s.reshape(Bb, T, C)
    t_idx = jax.lax.broadcasted_iota(jnp.int32, (Bb, T, C), 1)
    p2s = jnp.where(t_idx == 0, 0.0, p2s)

    even = p0 + p2s                    # conv rows 2j,   j = 0..T-1
    odd = p1                           # conv rows 2j+1, j = 0..T-1
    tail = p2[:, T - 1:T, :]           # conv row 2T (row 2T+1 is the output_padding zero row)

    # ---- Dropout: identity (eval mode) ----

    # ---- Fp32GroupNorm(num_groups=1): one-pass stats over the FULL conv output ----
    n_el = float((T * s + k - 1) * C)                         # includes tail + zero row
    s1 = (jnp.sum(even, axis=(1, 2), keepdims=True)
          + jnp.sum(odd, axis=(1, 2), keepdims=True)
          + jnp.sum(tail, axis=(1, 2), keepdims=True))        # (Bb,1,1) == sum of y
    s2 = (jnp.sum(even * even, axis=(1, 2), keepdims=True)
          + jnp.sum(odd * odd, axis=(1, 2), keepdims=True)
          + jnp.sum(tail * tail, axis=(1, 2), keepdims=True)) # (Bb,1,1) == sum of y^2
    mean = s1 * (1.0 / n_el)
    var = s2 * (1.0 / n_el) - mean * mean                     # biased variance
    rstd = jax.lax.rsqrt(var + GN_EPS)                        # EUP

    # fold normalization + affine + residual_scale into one scale/shift pair
    g = gamma_ref[...]                                        # (1, C), already *RES_SCALE
    b_ = beta_ref[...]                                        # (1, C), already *RES_SCALE
    scale = rstd * g[None]                                    # (Bb, 1, C)
    shift = b_[None] - mean * scale                           # (Bb, 1, C)

    # ---- ReLU + skip connection (repeat_interleave) + scaling ----
    res = x.astype(jnp.float32) * RES_SCALE                   # residual in f32
    # lane-dense direct stores: out[b, t, ph*C + c] == final[b, t*s + ph, c]
    out_ref[:, :, 0:C] = (jnp.maximum(even * scale + shift, 0.0) + res).astype(out_ref.dtype)
    out_ref[:, :, C:2 * C] = (jnp.maximum(odd * scale + shift, 0.0) + res).astype(out_ref.dtype)

    # log_compression = False -> no abs/log


def _pick_batch_block(B, T, C, vmem_budget_bytes=10 * 1024 * 1024):
    """Largest divisor of B that (a) keeps the per-step working set under budget
    and (b) leaves >= 2 grid steps whenever B >= 2 (pipelining / megacore)."""
    # rough per-batch-row bytes: bf16 x (double-buffered) + bf16 out 2C (double-buffered)
    # + f32 intermediates (p_all + p0/p1/p2/p2s/even) ~= 40 * T * C
    per_row = 40 * T * C
    cap = max(1, vmem_budget_bytes // per_row)
    if B >= 2:
        cap = min(cap, B // 2)
    cap = max(1, min(cap, B))
    bb = 1
    for d in range(1, cap + 1):
        if B % d == 0:
            bb = d
    return bb


def conv_upsampler(x, w, gamma, beta, *, batch_block=None, out_dtype=jnp.bfloat16):
    """x: (B, T, C); w: (K, C, C); gamma/beta: (C,). Returns (out, padding, mask)."""
    B, T, C = x.shape
    s = STRIDE
    assert w.shape == (K, C, C)
    if batch_block is None:
        batch_block = _pick_batch_block(B, T, C)
    assert B % batch_block == 0, "batch_block must divide B in this simple wrapper"
    nb = B // batch_block

    # bf16 input read (MXU rounds to bf16 anyway; halves the input HBM bytes)
    xb = x.astype(jnp.bfloat16)
    # (K, C_in, C_out) -> (C_in, K*C_out), bf16 for the MXU
    w_flat = jnp.transpose(w, (1, 0, 2)).reshape(C, K * C).astype(jnp.bfloat16)
    gamma_s = (gamma.astype(jnp.float32) * RES_SCALE).reshape(1, C)
    beta_s = (beta.astype(jnp.float32) * RES_SCALE).reshape(1, C)

    out3 = pl.pallas_call(
        conv_upsampler_kernel,
        out_shape=jax.ShapeDtypeStruct((B, T, s * C), out_dtype),
        grid_spec=pltpu.PrefetchScalarGridSpec(
            num_scalar_prefetch=0,
            grid=(nb,),
            in_specs=[
                pl.BlockSpec((batch_block, T, C), lambda i: (i, 0, 0)),
                pl.BlockSpec((C, K * C), lambda i: (0, 0)),
                pl.BlockSpec((1, C), lambda i: (0, 0)),
                pl.BlockSpec((1, C), lambda i: (0, 0)),
            ],
            out_specs=pl.BlockSpec((batch_block, T, s * C), lambda i: (i, 0, 0)),
        ),
        compiler_params=pltpu.CompilerParams(
            dimension_semantics=("parallel",),
            vmem_limit_bytes=32 * 1024 * 1024,  # safe on v5e/v6e/v7x; blocks budgeted ~10 MiB
        ),
    )(xb, w_flat, gamma_s, beta_s)

    # (B, T, s*C) -> (B, T*s, C) is a contiguous (free) reshape
    out = out3.reshape(B, T * s, C)
    # TODO(synk): padding / mask_indices repeat_interleave not implemented (inputs are None here).
    # TODO(synk): for very long T, add a time-tiled two-pass GroupNorm (grid=(nb, nt), scratch
    #             s1/s2 accumulators) so per-step blocks stay ~1-2 MiB independent of T.
    return out, None, None


def ref_forward(x, w, gamma, beta):
    """NumPy reference mirroring the PyTorch forward (eval mode).

    x is rounded to bf16 (matching the kernel's bf16 input read / MXU path) and
    all downstream math is f32; the kernel output is additionally bf16-rounded
    on store, covered by the comparison tolerance.
    """
    B, T, C = x.shape
    s, k = STRIDE, K
    l_out = T * s + k - 1
    xb = np.asarray(jnp.asarray(x).astype(jnp.bfloat16).astype(jnp.float32))
    wb = np.asarray(jnp.asarray(w).astype(jnp.bfloat16).astype(jnp.float32))
    y = np.zeros((B, l_out, C), np.float32)
    for kk in range(k):
        p = (xb @ wb[kk]).astype(np.float32)           # (B, T, C)
        for t in range(T):
            y[:, t * s + kk, :] += p[:, t, :]
    mean = y.reshape(B, -1).mean(axis=1)[:, None, None]
    var = ((y - mean) ** 2).reshape(B, -1).mean(axis=1)[:, None, None]
    yn = (y - mean) / np.sqrt(var + GN_EPS)
    yn = yn * gamma[None, None, :] + beta[None, None, :]
    yn = np.maximum(yn, 0.0)
    res = np.repeat(xb, s, axis=1)                     # repeat_interleave along time
    return (yn[:, : T * s, :] + res) * RES_SCALE


if __name__ == "__main__":
    B, T, C = 2, 8, 128
    key = jax.random.PRNGKey(0)
    kx, kw, kg, kb = jax.random.split(key, 4)

    x = jax.random.normal(kx, (B, T, C), jnp.float32)
    w = jax.random.normal(kw, (K, C, C), jnp.float32) * 0.05  # ConvTranspose1d weight (no bias)
    gamma = 1.0 + 0.1 * jax.random.normal(kg, (C,), jnp.float32)
    beta = 0.1 * jax.random.normal(kb, (C,), jnp.float32)

    out, pad, mask = conv_upsampler(x, w, gamma, beta)
    out = jax.block_until_ready(out)

    ref = ref_forward(np.asarray(x), np.asarray(w), np.asarray(gamma), np.asarray(beta))
    assert out.shape == (B, T * STRIDE, C)
    assert pad is None and mask is None
    out_f32 = np.asarray(jnp.asarray(out, dtype=jnp.float32))
    err = np.abs(out_f32 - ref).max()
    assert np.allclose(out_f32, ref, atol=3e-2, rtol=3e-2), f"max err {err}"
    print("KERNEL_OK")
</pallas_src>

<mosaic_0001>
module attributes {stable_mosaic.version = 11 : i64} {
  func.func @conv_upsampler_kernel(%arg0: i32, %arg1: memref<1x8x128xbf16, #tpu.memory_space<vmem>>, %arg2: memref<128x384xbf16, #tpu.memory_space<vmem>>, %arg3: memref<1x128xf32, #tpu.memory_space<vmem>>, %arg4: memref<1x128xf32, #tpu.memory_space<vmem>>, %arg5: memref<1x8x256xbf16, #tpu.memory_space<vmem>>) attributes {dimension_semantics = [#tpu.dimension_semantics<parallel>], iteration_bounds = array<i64: 2>, scalar_prefetch = 0 : i64, scratch_operands = 0 : i64, tpu.core_type = #tpu.core_type<tc>, window_params = [{transform_indices = @transform_0, window_bounds = array<i64: 1, 8, 128>}, {pipeline_mode = #tpu.pipeline_mode<synchronous>, transform_indices = @transform_1, window_bounds = array<i64: 128, 384>}, {pipeline_mode = #tpu.pipeline_mode<synchronous>, transform_indices = @transform_2, window_bounds = array<i64: 1, 128>}, {pipeline_mode = #tpu.pipeline_mode<synchronous>, transform_indices = @transform_3, window_bounds = array<i64: 1, 128>}, {transform_indices = @transform_4, window_bounds = array<i64: 1, 8, 256>}]} {
    %c0 = arith.constant 0 : index
    %c0_0 = arith.constant 0 : index
    %c0_1 = arith.constant 0 : index
    %0 = vector.load %arg1[%c0, %c0_0, %c0_1] : memref<1x8x128xbf16, #tpu.memory_space<vmem>>, vector<1x8x128xbf16>
    %1 = vector.shape_cast %0 : vector<1x8x128xbf16> to vector<8x128xbf16>
    %c0_2 = arith.constant 0 : index
    %c0_3 = arith.constant 0 : index
    %2 = vector.load %arg2[%c0_2, %c0_3] : memref<128x384xbf16, #tpu.memory_space<vmem>>, vector<128x384xbf16>
    %cst = arith.constant dense<0.000000e+00> : vector<8x384xf32>
    %3 = tpu.matmul %1, %2, %cst {dimension_numbers = #tpu.dot_dimension_numbers<[1], [0], [0], [1], [0, 0, 1, 1], [], []>} : vector<8x128xbf16>, vector<128x384xbf16>, vector<8x384xf32> -> vector<8x384xf32>
    %4 = vector.extract_strided_slice %3 {offsets = [0, 0], sizes = [8, 128], strides = [1, 1]} : vector<8x384xf32> to vector<8x128xf32>
    %5 = vector.extract_strided_slice %3 {offsets = [0, 128], sizes = [8, 128], strides = [1, 1]} : vector<8x384xf32> to vector<8x128xf32>
    %6 = vector.extract_strided_slice %3 {offsets = [0, 256], sizes = [8, 128], strides = [1, 1]} : vector<8x384xf32> to vector<8x128xf32>
    %c1_i32 = arith.constant 1 : i32
    %7 = tpu.dynamic_rotate %6 by %c1_i32 dim 0 : vector<8x128xf32>, i32 -> vector<8x128xf32>
    %8 = vector.shape_cast %4 : vector<8x128xf32> to vector<1x8x128xf32>
    %9 = vector.shape_cast %5 : vector<8x128xf32> to vector<1x8x128xf32>
    %10 = vector.shape_cast %6 : vector<8x128xf32> to vector<1x8x128xf32>
    %11 = vector.shape_cast %7 : vector<8x128xf32> to vector<1x8x128xf32>
    %12 = tpu.iota {dimensions = array<i32: 1>} : vector<1x8x128xi32>
    %c0_i32 = arith.constant 0 : i32
    %13 = vector.broadcast %c0_i32 : i32 to vector<1x8x128xi32>
    %14 = arith.cmpi eq, %12, %13 : vector<1x8x128xi32>
    %cst_4 = arith.constant 0.000000e+00 : f32
    %15 = vector.broadcast %cst_4 : f32 to vector<1x8x128xf32>
    %16 = arith.select %14, %15, %11 : vector<1x8x128xi1>, vector<1x8x128xf32>
    %17 = arith.addf %8, %16 : vector<1x8x128xf32>
    %18 = vector.extract_strided_slice %10 {offsets = [0, 7, 0], sizes = [1, 1, 128], strides = [1, 1, 1]} : vector<1x8x128xf32> to vector<1x1x128xf32>
    %cst_5 = arith.constant dense<0.000000e+00> : vector<1xf32>
    %19 = vector.multi_reduction <add>, %17, %cst_5 [1, 2] : vector<1x8x128xf32> to vector<1xf32>
    %20 = vector.shape_cast %19 : vector<1xf32> to vector<1x1x1xf32>
    %cst_6 = arith.constant dense<0.000000e+00> : vector<1xf32>
    %21 = vector.multi_reduction <add>, %9, %cst_6 [1, 2] : vector<1x8x128xf32> to vector<1xf32>
    %22 = vector.shape_cast %21 : vector<1xf32> to vector<1x1x1xf32>
    %23 = arith.addf %20, %22 : vector<1x1x1xf32>
    %cst_7 = arith.constant dense<0.000000e+00> : vector<1xf32>
    %24 = vector.multi_reduction <add>, %18, %cst_7 [1, 2] : vector<1x1x128xf32> to vector<1xf32>
    %25 = vector.shape_cast %24 : vector<1xf32> to vector<1x1x1xf32>
    %26 = arith.addf %23, %25 : vector<1x1x1xf32>
    %27 = arith.mulf %17, %17 : vector<1x8x128xf32>
    %cst_8 = arith.constant dense<0.000000e+00> : vector<1xf32>
    %28 = vector.multi_reduction <add>, %27, %cst_8 [1, 2] : vector<1x8x128xf32> to vector<1xf32>
    %29 = vector.shape_cast %28 : vector<1xf32> to vector<1x1x1xf32>
    %30 = arith.mulf %9, %9 : vector<1x8x128xf32>
    %cst_9 = arith.constant dense<0.000000e+00> : vector<1xf32>
    %31 = vector.multi_reduction <add>, %30, %cst_9 [1, 2] : vector<1x8x128xf32> to vector<1xf32>
    %32 = vector.shape_cast %31 : vector<1xf32> to vector<1x1x1xf32>
    %33 = arith.addf %29, %32 : vector<1x1x1xf32>
    %34 = arith.mulf %18, %18 : vector<1x1x128xf32>
    %cst_10 = arith.constant dense<0.000000e+00> : vector<1xf32>
    %35 = vector.multi_reduction <add>, %34, %cst_10 [1, 2] : vector<1x1x128xf32> to vector<1xf32>
    %36 = vector.shape_cast %35 : vector<1xf32> to vector<1x1x1xf32>
    %37 = arith.addf %33, %36 : vector<1x1x1xf32>
    %cst_11 = arith.constant 4.34027781E-4 : f32
    %38 = vector.broadcast %cst_11 : f32 to vector<1x1x1xf32>
    %39 = arith.mulf %26, %38 : vector<1x1x1xf32>
    %cst_12 = arith.constant 4.34027781E-4 : f32
    %40 = vector.broadcast %cst_12 : f32 to vector<1x1x1xf32>
    %41 = arith.mulf %37, %40 : vector<1x1x1xf32>
    %42 = arith.mulf %39, %39 : vector<1x1x1xf32>
    %43 = arith.subf %41, %42 : vector<1x1x1xf32>
    %cst_13 = arith.constant 9.99999974E-6 : f32
    %44 = vector.broadcast %cst_13 : f32 to vector<1x1x1xf32>
    %45 = arith.addf %43, %44 : vector<1x1x1xf32>
    %46 = math.rsqrt %45 : vector<1x1x1xf32>
    %c0_14 = arith.constant 0 : index
    %c0_15 = arith.constant 0 : index
    %47 = vector.load %arg3[%c0_14, %c0_15] : memref<1x128xf32, #tpu.memory_space<vmem>>, vector<1x128xf32>
    %c0_16 = arith.constant 0 : index
    %c0_17 = arith.constant 0 : index
    %48 = vector.load %arg4[%c0_16, %c0_17] : memref<1x128xf32, #tpu.memory_space<vmem>>, vector<1x128xf32>
    %49 = vector.shape_cast %47 : vector<1x128xf32> to vector<1x1x128xf32>
    %50 = vector.broadcast %46 : vector<1x1x1xf32> to vector<1x1x128xf32>
    %51 = arith.mulf %50, %49 : vector<1x1x128xf32>
    %52 = vector.shape_cast %48 : vector<1x128xf32> to vector<1x1x128xf32>
    %53 = vector.broadcast %39 : vector<1x1x1xf32> to vector<1x1x128xf32>
    %54 = arith.mulf %53, %51 : vector<1x1x128xf32>
    %55 = arith.subf %52, %54 : vector<1x1x128xf32>
    %56 = arith.extf %0 : vector<1x8x128xbf16> to vector<1x8x128xf32>
    %cst_18 = arith.constant 0.632455527 : f32
    %57 = vector.broadcast %cst_18 : f32 to vector<1x8x128xf32>
    %58 = arith.mulf %56, %57 : vector<1x8x128xf32>
    %59 = vector.broadcast %51 : vector<1x1x128xf32> to vector<1x8x128xf32>
    %60 = arith.mulf %17, %59 : vector<1x8x128xf32>
    %61 = vector.broadcast %55 : vector<1x1x128xf32> to vector<1x8x128xf32>
    %62 = arith.addf %60, %61 : vector<1x8x128xf32>
    %cst_19 = arith.constant 0.000000e+00 : f32
    %63 = vector.broadcast %cst_19 : f32 to vector<1x8x128xf32>
    %64 = arith.maximumf %62, %63 : vector<1x8x128xf32>
    %65 = arith.addf %64, %58 : vector<1x8x128xf32>
    %66 = arith.truncf %65 : vector<1x8x128xf32> to vector<1x8x128xbf16>
    %c0_20 = arith.constant 0 : index
    %c0_21 = arith.constant 0 : index
    %c0_22 = arith.constant 0 : index
    %67 = vector.load %arg5[%c0_20, %c0_21, %c0_22] : memref<1x8x256xbf16, #tpu.memory_space<vmem>>, vector<1x8x128xbf16>
    tpu.vector_store %arg5[%c0_20, %c0_21, %c0_22], %66 {strides = array<i32>} : memref<1x8x256xbf16, #tpu.memory_space<vmem>>, vector<1x8x128xbf16>,
    %68 = vector.broadcast %51 : vector<1x1x128xf32> to vector<1x8x128xf32>
    %69 = arith.mulf %9, %68 : vector<1x8x128xf32>
    %70 = vector.broadcast %55 : vector<1x1x128xf32> to vector<1x8x128xf32>
    %71 = arith.addf %69, %70 : vector<1x8x128xf32>
    %cst_23 = arith.constant 0.000000e+00 : f32
    %72 = vector.broadcast %cst_23 : f32 to vector<1x8x128xf32>
    %73 = arith.maximumf %71, %72 : vector<1x8x128xf32>
    %74 = arith.addf %73, %58 : vector<1x8x128xf32>
    %75 = arith.truncf %74 : vector<1x8x128xf32> to vector<1x8x128xbf16>
    %c0_24 = arith.constant 0 : index
    %c0_25 = arith.constant 0 : index
    %c128 = arith.constant 128 : index
    %76 = vector.load %arg5[%c0_24, %c0_25, %c128] : memref<1x8x256xbf16, #tpu.memory_space<vmem>>, vector<1x8x128xbf16>
    tpu.vector_store %arg5[%c0_24, %c0_25, %c128], %75 {strides = array<i32>} : memref<1x8x256xbf16, #tpu.memory_space<vmem>>, vector<1x8x128xbf16>,
    return
  }
  func.func @transform_0(%arg0: i32) -> (i32, i32, i32) {
    %c0_i32 = arith.constant 0 : i32
    %c0_i32_0 = arith.constant 0 : i32
    %c0_i32_1 = arith.constant 0 : i32
    return %arg0, %c0_i32, %c0_i32_0 : i32, i32, i32
  }
  func.func @transform_1(%arg0: i32) -> (i32, i32) {
    %c0_i32 = arith.constant 0 : i32
    %c0_i32_0 = arith.constant 0 : i32
    %c0_i32_1 = arith.constant 0 : i32
    return %c0_i32, %c0_i32_0 : i32, i32
  }
  func.func @transform_2(%arg0: i32) -> (i32, i32) {
    %c0_i32 = arith.constant 0 : i32
    %c0_i32_0 = arith.constant 0 : i32
    %c0_i32_1 = arith.constant 0 : i32
    return %c0_i32, %c0_i32_0 : i32, i32
  }
  func.func @transform_3(%arg0: i32) -> (i32, i32) {
    %c0_i32 = arith.constant 0 : i32
    %c0_i32_0 = arith.constant 0 : i32
    %c0_i32_1 = arith.constant 0 : i32
    return %c0_i32, %c0_i32_0 : i32, i32
  }
  func.func @transform_4(%arg0: i32) -> (i32, i32, i32) {
    %c0_i32 = arith.constant 0 : i32
    %c0_i32_0 = arith.constant 0 : i32
    %c0_i32_1 = arith.constant 0 : i32
    return %arg0, %c0_i32, %c0_i32_0 : i32, i32, i32
  }
}

</mosaic_0001>

<llo_original>
// kernel: tpu_custom_call.1
$region0: #{tpu_custom_call.1}
  #allocation0 [shape = 'u32[]', space=smem, size = 0x4, offset = 0x4, fixed_abs, tag = 'smem constant byte address 0x4 - core index']
  #allocation1 [shape = 'u32[72,128]{1,0:T(1,128)}', space=vmem, size = 0x9000, scoped, tag = 'internal scratch']
  %s0 = inlined_call_operand.hbm [shape: bf16[2,8,128], index: 0, kind: input, shape index: {}]
  %s1 = inlined_call_operand.hbm [shape: bf16[128,384], index: 1, kind: input, shape index: {}]
  %s2 = inlined_call_operand.vmem [shape: f32[1,128], index: 2, kind: input, shape index: {}]
  %s3 = inlined_call_operand.vmem [shape: f32[1,128], index: 3, kind: input, shape index: {}]
  %s4 = inlined_call_operand.hbm [shape: bf16[2,8,256], index: 4, kind: output, shape index: {}]
  %s5 = sld [smem:[#allocation0]]
  $region57: #{tpu_custom_call.1} parent=0
    _
  %s7 = ssub.s32 1, %s5
  %s8 = scalar_select 0, %s7, %s5
  $region1: #{tpu_custom_call.1} parent=0
    #allocation2 [shape = 'u8[4096]{0}', space=vmem, size = 0x1000, scoped, tag = 'input window, operand 0']
    #allocation3 [shape = 's32[2]{0}', space=sflag, size = 0x8, scoped, tag = 'scoped memory for tpu_custom_call.1']
    #allocation4 [shape = 's32[2]{0}', space=sflag, size = 0x8, scoped, tag = 'scoped memory for tpu_custom_call.1']
    #allocation5 [shape = 'u8[98304]{0}', space=vmem, size = 0x18000, scoped, tag = 'input window, operand 1, single buffered']
    #allocation6 [shape = 's32[1]{0}', space=sflag, size = 0x4, scoped, tag = 'scoped memory for tpu_custom_call.1']
    #allocation7 [shape = 'u8[8192]{0}', space=vmem, size = 0x2000, scoped, tag = 'output window, operand 0']
    %9 = vsyncpa [#allocation3], 0
    %s10 = scalar_lea.sflag [#allocation3], 1
    %11 = vsyncpa %s10, 0
    %12 = vsyncpa [#allocation6], 0
    %13 = vsyncpa [#allocation4], 0
    %s14 = scalar_lea.sflag [#allocation4], 1
    %15 = vsyncpa %s14, 0
    loop: start=0, step=1, limit=4
    $region2: #{tpu_custom_call.1} parent=1 // loop_pre_header
      _
    $region3: #{tpu_custom_call.1} parent=1 // loop_header
      %s17 = sphi 0, %s21
      %p18 = scmp.ge.s32.totalorder %s17, 4
      %s27 = sphi 0, %s29
      %s30 = sphi 0, %s27
      %s31 = sphi 0, %s30
      %s47 = sphi 0, %s31
      %s51 = sphi 0, %s51
      %s53 = sphi 0, %s51
      %s54 = sphi 0, %s53
      %s68 = sphi 0, %s54
      %s72 = sphi 0, %s72
      %s74 = sphi 0, %s72
      %s75 = sphi 0, %s74
      %s89 = sphi 0, %s75
      %s93 = sphi 0, %s93
      %s95 = sphi 0, %s93
      %s96 = sphi 0, %s95
      %s110 = sphi 0, %s96
      %s116 = sphi 0, %s118
      %s119 = sphi 0, %s116
      %s120 = sphi 0, %s119
      %s136 = sphi 0, %s120
    $region4: #{tpu_custom_call.1} parent=1 // loop_header_branch
      %20 = sbr.rel (%p18) target = $region8
    $region5: #{tpu_custom_call.1} parent=1 // loop_body
      %s22 = ssub.s32 %s17, 1
      %s23 = ssub.s32 %s17, 2
      %s24 = sadd.s32 %s17, 1
      %s25 = ssub.s32 %s17, %s24
      %p26 = scmp.eq.s32.totalorder %s25, 0
      %s28 = sadd.s32 %s27, 1
      %s29 = scalar_select %p26, %s27, %s28
      %p32 = pneg %p26
      %p33 = scmp.eq.s32.totalorder %s17, 1
      %p34 = por %p32, %p33
      %p35 = scmp.ne.s32.totalorder %s27, %s30
      %p36 = scmp.eq.s32.totalorder %s17, 0
      %p37 = por %p35, %p36
      %p38 = scmp.ne.s32.totalorder %s27, %s30
      %p39 = scmp.eq.s32.totalorder %s22, 1
      %p40 = por %p38, %p39
      %p41 = scmp.ne.s32.totalorder %s30, %s31
      %p42 = scmp.eq.s32.totalorder %s22, 0
      %p43 = por %p41, %p42
      %p44 = scmp.ne.s32.totalorder %s30, %s31
      %p45 = scmp.eq.s32.totalorder %s23, 1
      %p46 = por %p44, %p45
      %p48 = scmp.ne.s32.totalorder %s31, %s47
      %p49 = scmp.eq.s32.totalorder %s23, 0
      %p50 = por %p48, %p49
      %s52 = sadd.s32 %s51, 1
      %p55 = scmp.eq.s32.totalorder %s17, 1
      %p56 = scmp.ne.s32.totalorder %s51, %s53
      %p57 = scmp.eq.s32.totalorder %s17, 0
      %p58 = por %p56, %p57
      %p59 = scmp.ne.s32.totalorder %s51, %s53
      %p60 = scmp.eq.s32.totalorder %s22, 1
      %p61 = por %p59, %p60
      %p62 = scmp.ne.s32.totalorder %s53, %s54
      %p63 = scmp.eq.s32.totalorder %s22, 0
      %p64 = por %p62, %p63
      %p65 = scmp.ne.s32.totalorder %s53, %s54
      %p66 = scmp.eq.s32.totalorder %s23, 1
      %p67 = por %p65, %p66
      %p69 = scmp.ne.s32.totalorder %s54, %s68
      %p70 = scmp.eq.s32.totalorder %s23, 0
      %p71 = por %p69, %p70
      %s73 = sadd.s32 %s72, 1
      %p76 = scmp.eq.s32.totalorder %s17, 1
      %p77 = scmp.ne.s32.totalorder %s72, %s74
      %p78 = scmp.eq.s32.totalorder %s17, 0
      %p79 = por %p77, %p78
      %p80 = scmp.ne.s32.totalorder %s72, %s74
      %p81 = scmp.eq.s32.totalorder %s22, 1
      %p82 = por %p80, %p81
      %p83 = scmp.ne.s32.totalorder %s74, %s75
      %p84 = scmp.eq.s32.totalorder %s22, 0
      %p85 = por %p83, %p84
      %p86 = scmp.ne.s32.totalorder %s74, %s75
      %p87 = scmp.eq.s32.totalorder %s23, 1
      %p88 = por %p86, %p87
      %p90 = scmp.ne.s32.totalorder %s75, %s89
      %p91 = scmp.eq.s32.totalorder %s23, 0
      %p92 = por %p90, %p91
      %s94 = sadd.s32 %s93, 1
      %p97 = scmp.eq.s32.totalorder %s17, 1
      %p98 = scmp.ne.s32.totalorder %s93, %s95
      %p99 = scmp.eq.s32.totalorder %s17, 0
      %p100 = por %p98, %p99
      %p101 = scmp.ne.s32.totalorder %s93, %s95
      %p102 = scmp.eq.s32.totalorder %s22, 1
      %p103 = por %p101, %p102
      %p104 = scmp.ne.s32.totalorder %s95, %s96
      %p105 = scmp.eq.s32.totalorder %s22, 0
      %p106 = por %p104, %p105
      %p107 = scmp.ne.s32.totalorder %s95, %s96
      %p108 = scmp.eq.s32.totalorder %s23, 1
      %p109 = por %p107, %p108
      %p111 = scmp.ne.s32.totalorder %s96, %s110
      %p112 = scmp.eq.s32.totalorder %s23, 0
      %p113 = por %p111, %p112
      %s114 = ssub.s32 %s17, %s24
      %p115 = scmp.eq.s32.totalorder %s114, 0
      %s117 = sadd.s32 %s116, 1
      %s118 = scalar_select %p115, %s116, %s117
      %p121 = pneg %p115
      %p122 = scmp.eq.s32.totalorder %s17, 1
      %p123 = por %p121, %p122
      %p124 = scmp.ne.s32.totalorder %s116, %s119
      %p125 = scmp.eq.s32.totalorder %s17, 0
      %p126 = por %p124, %p125
      %p127 = scmp.ne.s32.totalorder %s116, %s119
      %p128 = scmp.eq.s32.totalorder %s22, 1
      %p129 = por %p127, %p128
      %p130 = scmp.ne.s32.totalorder %s119, %s120
      %p131 = scmp.eq.s32.totalorder %s22, 0
      %p132 = por %p130, %p131
      %p133 = scmp.ne.s32.totalorder %s119, %s120
      %p134 = scmp.eq.s32.totalorder %s23, 1
      %p135 = por %p133, %p134
      %p137 = scmp.ne.s32.totalorder %s120, %s136
      %p138 = scmp.eq.s32.totalorder %s23, 0
      %p139 = por %p137, %p138
      %p140 = scmp.le.s32.totalorder 1, %s17
      %p141 = scmp.lt.s32.totalorder %s17, 3
      %p142 = pnand %p140, %p141
      %p143 = pneg %p142
      // Predicated region
      $region9: #{tpu_custom_call.1} parent=5 // pred_check
        _
      $region10: #{tpu_custom_call.1} parent=5 // pred_check_branch
        %145 = sbr.rel (%p142) target = $region12
      $region11: #{tpu_custom_call.1} parent=5 // pred_region
        %s146 = ssub.s32 %s17, 1
        // Predicated region
        $region13: #{tpu_custom_call.1} parent=11 // pred_check
          %p147 = pneg %p64
        $region14: #{tpu_custom_call.1} parent=11 // pred_check_branch
          %149 = sbr.rel (%p147) target = $region16
        $region15: #{tpu_custom_call.1} parent=11 // pred_region
          %151 = vsyncadd [#allocation6], 0
          %s152 = sshll.u32 %s1, 4
          %s153 = int_to_ptr.hbm [resolvable:$true] %s152
          %s154 = sshll.u32 [#allocation5], 4
          %s155 = int_to_ptr.vmem [resolvable:$true] %s154
          %160 = dma.hbm_to_vmem [thread:$0]  %s153, 3072, %s155, [#allocation6], 192, 192, 12
        $region16: #{tpu_custom_call.1} parent=11 // pred_fallthru
          _
        // Predicated region
        $region17: #{tpu_custom_call.1} parent=11 // pred_check
          %p161 = pneg %p85
        $region18: #{tpu_custom_call.1} parent=11 // pred_check_branch
          %163 = sbr.rel (%p161) target = $region20
        $region19: #{tpu_custom_call.1} parent=11 // pred_region
          _
        $region20: #{tpu_custom_call.1} parent=11 // pred_fallthru
          _
        // Predicated region
        $region21: #{tpu_custom_call.1} parent=11 // pred_check
          %p164 = pneg %p106
        $region22: #{tpu_custom_call.1} parent=11 // pred_check_branch
          %166 = sbr.rel (%p164) target = $region24
        $region23: #{tpu_custom_call.1} parent=11 // pred_region
          _
        $region24: #{tpu_custom_call.1} parent=11 // pred_fallthru
          _
      $region12: #{tpu_custom_call.1} parent=5 // pred_fallthru
        _
      %p167 = scmp.lt.s32.totalorder %s17, 2
      // Predicated region
      $region25: #{tpu_custom_call.1} parent=5 // pred_check
        %p168 = pneg %p167
      $region26: #{tpu_custom_call.1} parent=5 // pred_check_branch
        %170 = sbr.rel (%p168) target = $region28
      $region27: #{tpu_custom_call.1} parent=5 // pred_region
        // Predicated region
        $region29: #{tpu_custom_call.1} parent=27 // pred_check
          %p171 = pneg %p37
        $region30: #{tpu_custom_call.1} parent=27 // pred_check_branch
          %173 = sbr.rel (%p171) target = $region32
        $region31: #{tpu_custom_call.1} parent=27 // pred_region
          %s174 = sand.u32 %s27, 1
          %s175 = scalar_lea.sflag [#allocation3], %s174
          %s176 = sand.u32 %s27, 1
          %s177 = smul.addr %s176, 4
          %s178 = scalar_lea.vmem [#allocation2], %s177
          %180 = vsyncadd %s175, 0
          %s181 = smul.addr %s17, 4
          %s182 = scalar_lea.hbm %s0, %s181
          %s184 = sshll.u32 %s182, 4
          %s185 = int_to_ptr.hbm [resolvable:$true] %s184
          %s186 = sshll.u32 %s178, 4
          %s187 = int_to_ptr.vmem [resolvable:$true] %s186
          %189 = dma.hbm_to_vmem [thread:$0]  %s185, 64, %s187, %s175
        $region32: #{tpu_custom_call.1} parent=27 // pred_fallthru
          _
      $region28: #{tpu_custom_call.1} parent=5 // pred_fallthru
        _
      %p190 = scmp.le.s32.totalorder 1, %s17
      %p191 = scmp.lt.s32.totalorder %s17, 3
      %p192 = pnand %p190, %p191
      %p193 = pneg %p192
      // Predicated region
      $region33: #{tpu_custom_call.1} parent=5 // pred_check
        _
      $region34: #{tpu_custom_call.1} parent=5 // pred_check_branch
        %195 = sbr.rel (%p192) target = $region36
      $region35: #{tpu_custom_call.1} parent=5 // pred_region
        %s196 = ssub.s32 %s17, 1
        %s197 = sand.u32 %s30, 1
        %s198 = scalar_lea.sflag [#allocation3], %s197
        %s199 = sand.u32 %s30, 1
        %s200 = smul.addr %s199, 4
        %s201 = scalar_lea.vmem [#allocation2], %s200
        // Predicated region
        $region37: #{tpu_custom_call.1} parent=35 // pred_check
          %p202 = pneg %p43
        $region38: #{tpu_custom_call.1} parent=35 // pred_check_branch
          %204 = sbr.rel (%p202) target = $region40
        $region39: #{tpu_custom_call.1} parent=35 // pred_region
          %206 = dma.done %s198, 64
        $region40: #{tpu_custom_call.1} parent=35 // pred_fallthru
          _
        // Predicated region
        $region41: #{tpu_custom_call.1} parent=35 // pred_check
          %p207 = pneg %p64
        $region42: #{tpu_custom_call.1} parent=35 // pred_check_branch
          %209 = sbr.rel (%p207) target = $region44
        $region43: #{tpu_custom_call.1} parent=35 // pred_region
          %211 = dma.done [#allocation6], 3072
        $region44: #{tpu_custom_call.1} parent=35 // pred_fallthru
          _
        %s212 = sand.u32 %s30, 1
        %s213 = scalar_lea.sflag [#allocation3], %s212
        %s214 = sand.u32 %s30, 1
        %s215 = smul.addr %s214, 4
        %s216 = scalar_lea.vmem [#allocation2], %s215
        %p217 = pneg %p43
        %p218 = pneg %p40
        %p219 = pneg %p64
        %p220 = pneg %p61
        %p221 = pneg %p85
        %p222 = pneg %p82
        %p223 = pneg %p106
        %p224 = pneg %p103
        %p225 = pneg %p132
        %p226 = pneg %p129
        %s227 = sand.u32 %s119, 1
        %s228 = scalar_lea.sflag [#allocation4], %s227
        %s229 = sand.u32 %s119, 1
        %s230 = smul.addr %s229, 8
        %s231 = scalar_lea.vmem [#allocation7], %s230
        %v232 = vld [vmem:[%s201] sm:$0xf]
        %v233 = vld [vmem:[#allocation5] sm:$0xff]
        %v234 = vld [vmem:[#allocation5 + $0x8] sm:$0xf]
        %v235 = vld [vmem:[#allocation5 + $0xc] sm:$0xff]
        %v236 = vld [vmem:[#allocation5 + $0x14] sm:$0xf]
        %v237 = vld [vmem:[#allocation5 + $0x18] sm:$0xff]
        %v238 = vld [vmem:[#allocation5 + $0x20] sm:$0xf]
        %v239 = vld [vmem:[#allocation5 + $0x24] sm:$0xff]
        %v240 = vld [vmem:[#allocation5 + $0x2c] sm:$0xf]
        %v241 = vld [vmem:[#allocation5 + $0x30] sm:$0xff]
        %v242 = vld [vmem:[#allocation5 + $0x38] sm:$0xf]
        %v243 = vld [vmem:[#allocation5 + $0x3c] sm:$0xff]
        %v244 = vld [vmem:[#allocation5 + $0x44] sm:$0xf]
        %v245 = vld [vmem:[#allocation5 + $0x48] sm:$0xff]
        %v246 = vld [vmem:[#allocation5 + $0x50] sm:$0xf]
        %v247 = vld [vmem:[#allocation5 + $0x54] sm:$0xff]
        %v248 = vld [vmem:[#allocation5 + $0x5c] sm:$0xf]
        %v249 = vld [vmem:[#allocation5 + $0x60] sm:$0xff]
        %v250 = vld [vmem:[#allocation5 + $0x68] sm:$0xf]
        %v251 = vld [vmem:[#allocation5 + $0x6c] sm:$0xff]
        %v252 = vld [vmem:[#allocation5 + $0x74] sm:$0xf]
        %v253 = vld [vmem:[#allocation5 + $0x78] sm:$0xff]
        %v254 = vld [vmem:[#allocation5 + $0x80] sm:$0xf]
        %v255 = vld [vmem:[#allocation5 + $0x84] sm:$0xff]
        %v256 = vld [vmem:[#allocation5 + $0x8c] sm:$0xf]
        %v257 = vld [vmem:[#allocation5 + $0x90] sm:$0xff]
        %v258 = vld [vmem:[#allocation5 + $0x98] sm:$0xf]
        %v259 = vld [vmem:[#allocation5 + $0x9c] sm:$0xff]
        %v260 = vld [vmem:[#allocation5 + $0xa4] sm:$0xf]
        %v261 = vld [vmem:[#allocation5 + $0xa8] sm:$0xff]
        %v262 = vld [vmem:[#allocation5 + $0xb0] sm:$0xf]
        %v263 = vld [vmem:[#allocation5 + $0xb4] sm:$0xff]
        %v264 = vld [vmem:[#allocation5 + $0xbc] sm:$0xf]
        %v297 = vunpack.c.l.b16 %v233
        %v298 = vunpack.c.h.b16 %v233
        %v299 = vunpack.c.l.b16 %v234
        %v300 = vunpack.c.l.b16 %v235
        %v301 = vunpack.c.h.b16 %v235
        %v302 = vunpack.c.l.b16 %v236
        %v303 = vunpack.c.l.b16 %v237
        %v304 = vunpack.c.h.b16 %v237
        %v305 = vunpack.c.l.b16 %v238
        %v306 = vunpack.c.l.b16 %v239
        %v307 = vunpack.c.h.b16 %v239
        %v308 = vunpack.c.l.b16 %v240
        %v309 = vunpack.c.l.b16 %v241
        %v310 = vunpack.c.h.b16 %v241
        %v311 = vunpack.c.l.b16 %v242
        %v312 = vunpack.c.l.b16 %v243
        %v313 = vunpack.c.h.b16 %v243
        %v314 = vunpack.c.l.b16 %v244
        %v315 = vunpack.c.l.b16 %v245
        %v316 = vunpack.c.h.b16 %v245
        %v317 = vunpack.c.l.b16 %v246
        %v318 = vunpack.c.l.b16 %v247
        %v319 = vunpack.c.h.b16 %v247
        %v320 = vunpack.c.l.b16 %v248
        %v321 = vunpack.c.l.b16 %v249
        %v322 = vunpack.c.h.b16 %v249
        %v323 = vunpack.c.l.b16 %v250
        %v324 = vunpack.c.l.b16 %v251
        %v325 = vunpack.c.h.b16 %v251
        %v326 = vunpack.c.l.b16 %v252
        %v327 = vunpack.c.l.b16 %v253
        %v328 = vunpack.c.h.b16 %v253
        %v329 = vunpack.c.l.b16 %v254
        %v330 = vunpack.c.l.b16 %v255
        %v331 = vunpack.c.h.b16 %v255
        %v332 = vunpack.c.l.b16 %v256
        %v333 = vunpack.c.l.b16 %v257
        %v334 = vunpack.c.h.b16 %v257
        %v335 = vunpack.c.l.b16 %v258
        %v336 = vunpack.c.l.b16 %v259
        %v337 = vunpack.c.h.b16 %v259
        %v338 = vunpack.c.l.b16 %v260
        %v339 = vunpack.c.l.b16 %v261
        %v340 = vunpack.c.h.b16 %v261
        %v341 = vunpack.c.l.b16 %v262
        %v342 = vunpack.c.l.b16 %v263
        %v343 = vunpack.c.h.b16 %v263
        %v344 = vunpack.c.l.b16 %v264
        %v345 = vpack.c.b16 %v300, %v297
        %v346 = vpack.c.b16 %v301, %v298
        %v347 = vpack.c.b16 %v302, %v299
        %v348 = vpack.c.b16 %v306, %v303
        %v349 = vpack.c.b16 %v307, %v304
        %v350 = vpack.c.b16 %v308, %v305
        %v351 = vpack.c.b16 %v312, %v309
        %v352 = vpack.c.b16 %v313, %v310
        %v353 = vpack.c.b16 %v314, %v311
        %v354 = vpack.c.b16 %v318, %v315
        %v355 = vpack.c.b16 %v319, %v316
        %v356 = vpack.c.b16 %v320, %v317
        %v357 = vpack.c.b16 %v324, %v321
        %v358 = vpack.c.b16 %v325, %v322
        %v359 = vpack.c.b16 %v326, %v323
        %v360 = vpack.c.b16 %v330, %v327
        %v361 = vpack.c.b16 %v331, %v328
        %v362 = vpack.c.b16 %v332, %v329
        %v363 = vpack.c.b16 %v336, %v333
        %v364 = vpack.c.b16 %v337, %v334
        %v365 = vpack.c.b16 %v338, %v335
        %v366 = vpack.c.b16 %v342, %v339
        %v367 = vpack.c.b16 %v343, %v340
        %v368 = vpack.c.b16 %v344, %v341
        %393 = vmatpush.bf16.msra.mxu0 %v366
        %394 = vmatpush.bf16.msra.mxu0 %v363
        %395 = vmatpush.bf16.msra.mxu0 %v360
        %396 = vmatpush.bf16.msra.mxu0 %v357
        %397 = vmatpush.bf16.msra.mxu0 %v354
        %398 = vmatpush.bf16.msra.mxu0 %v351
        %399 = vmatpush.bf16.msra.mxu0 %v348
        %400 = vmatpush.bf16.msra.mxu0 %v345
        %401 = vmatmul.bf16.gmra.mxu0 %v232
        %v402 = vpop.f32.mrf.mxu0
        %v403 = vadd.f32 0.0, %v402
        %v404 = vpop.f32.mrf.mxu0
        %405 = vdwg.mxu0
        %406 = vmatpush.bf16.msra.mxu0 %v367
        %407 = vmatpush.bf16.msra.mxu0 %v364
        %408 = vmatpush.bf16.msra.mxu0 %v361
        %409 = vmatpush.bf16.msra.mxu0 %v358
        %410 = vmatpush.bf16.msra.mxu0 %v355
        %411 = vmatpush.bf16.msra.mxu0 %v352
        %412 = vmatpush.bf16.msra.mxu0 %v349
        %413 = vmatpush.bf16.msra.mxu0 %v346
        %414 = vmatmul.bf16.gmra.mxu0 %v232
        %v415 = vpop.f32.mrf.mxu0
        %v416 = vadd.f32 0.0, %v415
        %v417 = vpop.f32.mrf.mxu0
        %418 = vdwg.mxu0
        %419 = vmatpush.bf16.msra.mxu0 %v368
        %420 = vmatpush.bf16.msra.mxu0 %v365
        %421 = vmatpush.bf16.msra.mxu0 %v362
        %422 = vmatpush.bf16.msra.mxu0 %v359
        %423 = vmatpush.bf16.msra.mxu0 %v356
        %424 = vmatpush.bf16.msra.mxu0 %v353
        %425 = vmatpush.bf16.msra.mxu0 %v350
        %426 = vmatpush.bf16.msra.mxu0 %v347
        %427 = vmatmul.bf16.gmra.mxu0 %v232
        %v428 = vpop.f32.mrf.mxu0
        %v429 = vadd.f32 0.0, %v428
        %v430 = vpop.f32.mrf.mxu0
        %431 = vdwg.mxu0
        %v432 = vrot.slane %v429, 7
        %v433 = vlaneseq
        %v434 = vshrl.u32 %v433, 7
        %vm435 = vcmp.eq.s32.totalorder %v434, 0
        %v436 = vsel %vm435, 0.0, %v432
        %v437 = vadd.f32 %v403, %v436
        %438 = vadd.xlane.f32.xlu0 %v437
        %v439 = vpop.xlane.xlu0 %438
        %v440 = vrot.slane %v439, 4
        %v441 = vadd.f32 %v439, %v440
        %v442 = vrot.slane %v441, 2
        %v443 = vadd.f32 %v441, %v442
        %v444 = vrot.slane %v443, 1
        %v445 = vadd.f32 %v443, %v444
        %446 = vadd.xlane.f32.xlu0 %v416
        %v447 = vpop.xlane.xlu0 %446
        %v448 = vrot.slane %v447, 4
        %v449 = vadd.f32 %v447, %v448
        %v450 = vrot.slane %v449, 2
        %v451 = vadd.f32 %v449, %v450
        %v452 = vrot.slane %v451, 1
        %v453 = vadd.f32 %v451, %v452
        %v454 = vadd.f32 %v445, %v453
        %v456 = vrot.slane %v429, 7
        %vm458 = vcmask 1040384
        %v459 = vsel %vm458, %v456, 0.0
        %460 = vadd.xlane.f32.xlu0 %v459
        %v461 = vpop.xlane.xlu0 %460
        %v462 = vrot.slane %v461, 4
        %v463 = vadd.f32 %v461, %v462
        %v464 = vrot.slane %v463, 2
        %v465 = vadd.f32 %v463, %v464
        %v466 = vrot.slane %v465, 1
        %v467 = vadd.f32 %v465, %v466
        %v468 = vadd.f32 %v454, %v467
        %v469 = vmul.f32 %v437, %v437
        %470 = vadd.xlane.f32.xlu0 %v469
        %v471 = vpop.xlane.xlu0 %470
        %v472 = vrot.slane %v471, 4
        %v473 = vadd.f32 %v471, %v472
        %v474 = vrot.slane %v473, 2
        %v475 = vadd.f32 %v473, %v474
        %v476 = vrot.slane %v475, 1
        %v477 = vadd.f32 %v475, %v476
        %v478 = vmul.f32 %v416, %v416
        %479 = vadd.xlane.f32.xlu0 %v478
        %v480 = vpop.xlane.xlu0 %479
        %v481 = vrot.slane %v480, 4
        %v482 = vadd.f32 %v480, %v481
        %v483 = vrot.slane %v482, 2
        %v484 = vadd.f32 %v482, %v483
        %v485 = vrot.slane %v484, 1
        %v486 = vadd.f32 %v484, %v485
        %v487 = vadd.f32 %v477, %v486
        %v488 = vmul.f32 %v429, %v429
        %v490 = vrot.slane %v488, 7
        %v492 = vsel %vm458, %v490, 0.0
        %493 = vadd.xlane.f32.xlu0 %v492
        %v494 = vpop.xlane.xlu0 %493
        %v495 = vrot.slane %v494, 4
        %v496 = vadd.f32 %v494, %v495
        %v497 = vrot.slane %v496, 2
        %v498 = vadd.f32 %v496, %v497
        %v499 = vrot.slane %v498, 1
        %v500 = vadd.f32 %v498, %v499
        %v501 = vadd.f32 %v487, %v500
        %v502 = vmul.f32 %v468, 0.00043402778
        %v503 = vmul.f32 %v501, 0.00043402778
        %v504 = vmul.f32 %v502, %v502
        %v505 = vsub.f32 %v503, %v504
        %v506 = vadd.f32 %v505, 1e-05
        %v507 = vrsqrt.pop %v506
        %v508 = vmul.f32 %v507, %v506
        %v509 = vmul.f32 %v508, %v507
        %v510 = vmul.f32 0.5, %v509
        %v511 = vsub.f32 1.5, %v510
        %v512 = vmul.f32 %v507, %v511
        %vm513 = vweird.f32 %v506
        %vm514 = vweird.f32 %v507
        %vm515 = vmor %vm513, %vm514
        %v516 = vsel %vm515, %v507, %v512
        %v517 = vld [vmem:[%s2] sm:$0x1]
        %v518 = vld [vmem:[%s3] sm:$0x1]
        %v519 = vmul.f32 %v516, %v517
        %v520 = vmul.f32 %v502, %v519
        %v521 = vsub.f32 %v518, %v520
        %v522 = vunpack.c.l.bf16 %v232
        %v523 = vmul.f32 %v522, 0.6324555
        %v525 = vperm.slane %v519, 0
        %v527 = vmul.f32 %v437, %v525
        %v529 = vperm.slane %v521, 0
        %v531 = vadd.f32 %v527, %v529
        %v532 = vmax.f32 %v531, 0.0
        %v533 = vadd.f32 %v532, %v523
        %v534 = vpack.c.bf16 %v533, %v533
        %535 = vst [vmem:[%s231] sm:$0xf] %v534
        %v536 = vmul.f32 %v416, %v525
        %v537 = vadd.f32 %v536, %v529
        %v538 = vmax.f32 %v537, 0.0
        %v539 = vadd.f32 %v538, %v523
        %v540 = vpack.c.bf16 %v539, %v539
        %541 = vst [vmem:[%s231 + $0x4] sm:$0xf] %v540
        %s542 = sand.u32 %s119, 1
        %s543 = scalar_lea.sflag [#allocation4], %s542
        %s544 = sand.u32 %s119, 1
        %s545 = smul.addr %s544, 8
        %s546 = scalar_lea.vmem [#allocation7], %s545
        // Predicated region
        $region45: #{tpu_custom_call.1} parent=35 // pred_check
          %p547 = pneg %p129
        $region46: #{tpu_custom_call.1} parent=35 // pred_check_branch
          %549 = sbr.rel (%p547) target = $region48
        $region47: #{tpu_custom_call.1} parent=35 // pred_region
          %551 = vsyncadd %s543, 0
          %s552 = smul.addr %s22, 2
          %s553 = smul.addr %s552, 4
          %s554 = scalar_lea.hbm %s4, %s553
          %s556 = sshll.u32 %s546, 4
          %s557 = int_to_ptr.vmem [resolvable:$true] %s556
          %s558 = sshll.u32 %s554, 4
          %s559 = int_to_ptr.hbm [resolvable:$true] %s558
          %561 = dma.vmem_to_hbm [thread:$0]  %s557, 128, %s559, %s543
        $region48: #{tpu_custom_call.1} parent=35 // pred_fallthru
          _
      $region36: #{tpu_custom_call.1} parent=5 // pred_fallthru
        _
      %p562 = scmp.le.s32.totalorder 2, %s17
      // Predicated region
      $region49: #{tpu_custom_call.1} parent=5 // pred_check
        %p563 = pneg %p562
      $region50: #{tpu_custom_call.1} parent=5 // pred_check_branch
        %565 = sbr.rel (%p563) target = $region52
      $region51: #{tpu_custom_call.1} parent=5 // pred_region
        %s566 = ssub.s32 %s17, 2
        // Predicated region
        $region53: #{tpu_custom_call.1} parent=51 // pred_check
          %p567 = pneg %p135
        $region54: #{tpu_custom_call.1} parent=51 // pred_check_branch
          %569 = sbr.rel (%p567) target = $region56
        $region55: #{tpu_custom_call.1} parent=51 // pred_region
          %s570 = sand.u32 %s120, 1
          %s571 = scalar_lea.sflag [#allocation4], %s570
          %s572 = sand.u32 %s120, 1
          %s573 = smul.addr %s572, 8
          %s574 = scalar_lea.vmem [#allocation7], %s573
          %576 = dma.done %s571, 128
        $region56: #{tpu_custom_call.1} parent=51 // pred_fallthru
          _
      $region52: #{tpu_custom_call.1} parent=5 // pred_fallthru
        _
    $region6: #{tpu_custom_call.1} parent=1 // loop_footer
      %s21 = sadd.s32 1, %s17
    $region7: #{tpu_custom_call.1} parent=1 // loop_footer_branch
      %16 = sbr.rel target = $region3
    $region8: #{tpu_custom_call.1} parent=1 // loop_exit
      _
    %577 = vsyncpa [#allocation3], 1
    %s578 = scalar_lea.sflag [#allocation3], 1
    %579 = vsyncpa %s578, 1
    %580 = vsyncpa [#allocation6], 1
    %581 = vsyncpa [#allocation4], 1
    %s582 = scalar_lea.sflag [#allocation4], 1
    %583 = vsyncpa %s582, 1

</llo_original>
